<compile_context>
chip_gen: v6e
topology: v6e:2x2x1
jax: 0.10.0
libtpu: 0.0.40
codegen_flags: <defaults>
</compile_context>

<pallas_src>
import jax
import jax.numpy as jnp
from jax import lax
from jax.experimental import pallas as pl
from jax.experimental.pallas import tpu as pltpu


def _round_up(x: int, m: int) -> int:
    return ((x + m - 1) // m) * m


def rnn_chunk_kernel(x_ref, wh_ref, out_ref, h_ref):
    """One grid step == (batch tile bi, time chunk ci).

    x_ref:   (Tc, Bt, Hp) bf16  pre-projected inputs x_t @ Wx + b (time-major)
    wh_ref:  (Hp, Hp)     bf16  hidden->hidden weight, [in, out] layout, zero-padded
    out_ref: (Tc, Bt, Hp) f32   hidden states for this chunk (lane-dense slab)
    h_ref:   (Bt, Hp)     f32   VMEM scratch: hidden state carried across time chunks
    """
    ci = pl.program_id(1)

    @pl.when(ci == 0)
    def _():
        # init_hidden: zeros (reset at the start of every batch tile's time loop)
        h_ref[...] = jnp.zeros_like(h_ref)

    Tc, Bt, Hp = x_ref.shape
    wh = wh_ref[...]               # bf16 recurrent weight, resident for the whole chunk
    unroll = Tc if Tc <= 8 else 8  # partial unroll for long chunks

    if Bt >= 16 and Bt % 16 == 0:
        # Interleave two independent batch halves per timestep: two independent MXU
        # matmuls per step hide the serial matmul -> tanh -> matmul latency.
        half = Bt // 2

        def step(t, carry):
            h_a, h_b = carry
            x_t = x_ref[t].astype(jnp.float32)
            d_a = jnp.dot(h_a.astype(jnp.bfloat16), wh,
                          preferred_element_type=jnp.float32)
            d_b = jnp.dot(h_b.astype(jnp.bfloat16), wh,
                          preferred_element_type=jnp.float32)
            h_a = jnp.tanh(x_t[:half] + d_a)
            h_b = jnp.tanh(x_t[half:] + d_b)
            out_ref[t] = jnp.concatenate([h_a, h_b], axis=0).astype(out_ref.dtype)
            return (h_a, h_b)

        h0 = h_ref[...]
        h_a, h_b = lax.fori_loop(0, Tc, step, (h0[:half], h0[half:]), unroll=unroll)
        h_ref[...] = jnp.concatenate([h_a, h_b], axis=0)
    else:
        def step(t, h):
            d = jnp.dot(h.astype(jnp.bfloat16), wh,
                        preferred_element_type=jnp.float32)
            h = jnp.tanh(x_ref[t].astype(jnp.float32) + d)
            out_ref[t] = h.astype(out_ref.dtype)
            return h

        h_ref[...] = lax.fori_loop(0, Tc, step, h_ref[...], unroll=unroll)


def vanilla_rnn_forward(sequences, emb_table, wx, bx, wh, bh,
                        *, time_chunk: int = 32, batch_tile: int = 128):
    """sequences: [batch, seq_len] int32 token indices.
    Returns: [seq_len, batch, hidden_dim] float32 hidden states (PyTorch layout)."""
    B, S = sequences.shape
    H = wh.shape[0]

    # ---- pad to hardware granularity ----
    Hp = _round_up(H, 128)                     # lanes (lane-dense output)
    Bp = _round_up(B, 8)                       # sublanes

    # Batch tile: cap at half the padded batch (when possible) so the "parallel" grid
    # axis has >= 2 iterations and both v7x TensorCores get work (no-op on v5e/v6e).
    Bt = min(Bp, _round_up(batch_tile, 8))
    if Bp >= 16:
        Bt = min(Bt, max(8, ((Bp // 2) // 8) * 8))

    # Time chunk: prefer a divisor of S so the last chunk has no padded-step work.
    Tc = min(S, time_chunk)
    if S % Tc:
        best = max(d for d in range(1, Tc + 1) if S % d == 0)
        if best >= max(1, Tc // 2):
            Tc = best

    # Working-set estimate: double-buffered x/out slabs + double-buffered weight + scratch.
    def vmem_need(tc, bt):
        return (2 * tc * bt * Hp * 2      # x slab, bf16
                + 2 * tc * bt * Hp * 4    # out slab, f32
                + 2 * Hp * Hp * 2         # wh, bf16
                + bt * Hp * 4)            # carried hidden state

    try:
        vmem_cap = int(pltpu.get_tpu_info().vmem_capacity_bytes)
    except Exception:
        vmem_cap = 64 << 20               # conservative: v7x per-TC VMEM
    budget = int(0.80 * vmem_cap)
    while vmem_need(Tc, Bt) > budget:     # shrink tiling until it fits (v7x: 64 MiB)
        if Tc > 8:
            Tc = max(8, Tc // 2)
        elif Bt > 8:
            Bt = max(8, ((Bt // 2) // 8) * 8)
        elif Tc > 1:
            Tc = max(1, Tc // 2)
        else:
            break

    Bp = _round_up(Bp, Bt)
    n_btiles = Bp // Bt
    n_chunks = -(-S // Tc)
    Sp = n_chunks * Tc

    # Collapse the time-invariant input projection into the embedding table (XLA side):
    # proj_table[v] = emb_table[v] @ Wx^T + (b_x + b_h), zero-padded to Hp, cast bf16.
    proj = emb_table.astype(jnp.float32) @ wx.T.astype(jnp.float32) + (bx + bh)
    proj_p = jnp.zeros((emb_table.shape[0], Hp), jnp.float32).at[:, :H].set(proj)
    proj_p = proj_p.astype(jnp.bfloat16)

    # Gather directly in time-major order (only the tiny index matrix is transposed).
    xwx = proj_p[sequences.T]                                   # [S, B, Hp] bf16
    xwx = jnp.pad(xwx, ((0, Sp - S), (0, Bp - B), (0, 0)))

    # Hidden->hidden weight: PyTorch [out, in] -> [in, out]; zero-pad; bf16 for the MXU.
    wh_t = jnp.zeros((Hp, Hp), jnp.float32).at[:H, :H].set(wh.T).astype(jnp.bfloat16)

    # TODO(synk): dropout (nn.Dropout) not implemented; module constructed with dropout=None.

    grid_spec = pltpu.PrefetchScalarGridSpec(
        num_scalar_prefetch=0,
        grid=(n_btiles, n_chunks),
        in_specs=[
            pl.BlockSpec((Tc, Bt, Hp), lambda bi, ci: (ci, bi, 0)),
            # Constant across the grid; single-buffering (pipeline_mode=pl.Buffered(1))
            # would save Hp*Hp*2 bytes of VMEM but is left at the default for portability.
            pl.BlockSpec((Hp, Hp), lambda bi, ci: (0, 0)),
        ],
        out_specs=pl.BlockSpec((Tc, Bt, Hp), lambda bi, ci: (ci, bi, 0)),
        scratch_shapes=[pltpu.VMEM((Bt, Hp), jnp.float32)],     # carried hidden state
    )

    vmem_limit = min(max(int(1.5 * vmem_need(Tc, Bt)) + (4 << 20), 32 << 20),
                     int(0.9 * vmem_cap))

    out = pl.pallas_call(
        rnn_chunk_kernel,
        out_shape=jax.ShapeDtypeStruct((Sp, Bp, Hp), jnp.float32),
        grid_spec=grid_spec,
        compiler_params=pltpu.CompilerParams(
            # batch tiles are independent (megacore on v7x); time is sequential.
            dimension_semantics=("parallel", "arbitrary"),
            vmem_limit_bytes=vmem_limit,
        ),
    )(xwx, wh_t)

    return out[:S, :B, :H]


def reference_forward(sequences, emb_table, wx, bx, wh, bh):
    """Pure-JAX f32 reference mirroring the PyTorch forward."""
    B, S = sequences.shape
    H = wh.shape[0]
    embeddings = jnp.transpose(emb_table[sequences], (1, 0, 2))  # [S, B, E]
    h = jnp.zeros((B, H), jnp.float32)
    outs = []
    for t in range(S):
        x_t = embeddings[t]
        h = jnp.tanh(x_t @ wx.T + bx + h @ wh.T + bh)
        outs.append(h)
    return jnp.stack(outs)


if __name__ == "__main__":
    # Small shapes consistent with the module's forward.
    batch_size = 2
    seq_len = 8
    hidden_dim = 32
    embedding_dim = 16
    vocab_size = 50
    padding_index = 0

    key = jax.random.PRNGKey(0)
    k_emb, k_wx, k_bx, k_wh, k_bh, k_seq = jax.random.split(key, 6)

    # Deterministic parameter init (shapes from the module's __init__).
    emb_table = jax.random.normal(k_emb, (vocab_size, embedding_dim), jnp.float32) * 0.1
    emb_table = emb_table.at[padding_index].set(0.0)  # padding_idx row is zero

    # nn.Linear(hidden_dim, hidden_dim): weight [H, H], bias [H]
    wh = jax.random.normal(k_wh, (hidden_dim, hidden_dim), jnp.float32) * 0.1
    bh = jax.random.normal(k_bh, (hidden_dim,), jnp.float32) * 0.1
    # nn.Linear(embedding_dim, hidden_dim): weight [H, E], bias [H]
    wx = jax.random.normal(k_wx, (hidden_dim, embedding_dim), jnp.float32) * 0.1
    bx = jax.random.normal(k_bx, (hidden_dim,), jnp.float32) * 0.1

    sequences = jax.random.randint(k_seq, (batch_size, seq_len), 0, vocab_size, jnp.int32)

    out = vanilla_rnn_forward(sequences, emb_table, wx, bx, wh, bh)
    out = jax.block_until_ready(out)

    ref = reference_forward(sequences, emb_table, wx, bx, wh, bh)
    assert out.shape == (seq_len, batch_size, hidden_dim), out.shape
    # Recurrence runs in bf16 on the MXU (f32 accumulation), so tolerance is relaxed
    # vs. the pure-f32 reference; errors compound mildly over timesteps.
    max_err = float(jnp.max(jnp.abs(out - ref)))
    assert jnp.allclose(out, ref, atol=3e-2, rtol=3e-2), max_err

    print("KERNEL_OK")
</pallas_src>

<mosaic_0001>
module attributes {stable_mosaic.version = 11 : i64} {
  func.func @rnn_chunk_kernel(%arg0: i32, %arg1: i32, %arg2: memref<8x8x128xbf16, #tpu.memory_space<vmem>>, %arg3: memref<128x128xbf16, #tpu.memory_space<vmem>>, %arg4: memref<8x8x128xf32, #tpu.memory_space<vmem>>, %arg5: memref<8x128xf32, #tpu.memory_space<vmem>>) attributes {dimension_semantics = [#tpu.dimension_semantics<parallel>, #tpu.dimension_semantics<arbitrary>], iteration_bounds = array<i64: 1, 1>, scalar_prefetch = 0 : i64, scratch_operands = 1 : i64, tpu.core_type = #tpu.core_type<tc>, window_params = [{transform_indices = @transform_0, window_bounds = array<i64: 8, 8, 128>}, {pipeline_mode = #tpu.pipeline_mode<synchronous>, transform_indices = @transform_1, window_bounds = array<i64: 128, 128>}, {transform_indices = @transform_2, window_bounds = array<i64: 8, 8, 128>}]} {
    %c0_i32 = arith.constant 0 : i32
    %0 = arith.cmpi eq, %arg1, %c0_i32 : i32
    %1 = arith.extui %0 : i1 to i32
    %c0_i32_0 = arith.constant 0 : i32
    %2 = arith.cmpi ne, %1, %c0_i32_0 : i32
    scf.if %2 {
      %cst_46 = arith.constant 0.000000e+00 : f32
      %102 = vector.broadcast %cst_46 : f32 to vector<8x128xf32>
      %c0_47 = arith.constant 0 : index
      %c0_48 = arith.constant 0 : index
      %103 = vector.load %arg5[%c0_47, %c0_48] : memref<8x128xf32, #tpu.memory_space<vmem>>, vector<8x128xf32>
      tpu.vector_store %arg5[%c0_47, %c0_48], %102 {strides = array<i32>} : memref<8x128xf32, #tpu.memory_space<vmem>>, vector<8x128xf32>,
    } else {
    }
    %c0 = arith.constant 0 : index
    %c0_1 = arith.constant 0 : index
    %3 = vector.load %arg3[%c0, %c0_1] : memref<128x128xbf16, #tpu.memory_space<vmem>>, vector<128x128xbf16>
    %c0_2 = arith.constant 0 : index
    %c0_3 = arith.constant 0 : index
    %4 = vector.load %arg5[%c0_2, %c0_3] : memref<8x128xf32, #tpu.memory_space<vmem>>, vector<8x128xf32>
    %c0_i32_4 = arith.constant 0 : i32
    %5 = arith.truncf %4 : vector<8x128xf32> to vector<8x128xbf16>
    %cst = arith.constant dense<0.000000e+00> : vector<8x128xf32>
    %6 = tpu.matmul %5, %3, %cst {dimension_numbers = #tpu.dot_dimension_numbers<[1], [0], [0], [1], [0, 0, 1, 1], [], []>} : vector<8x128xbf16>, vector<128x128xbf16>, vector<8x128xf32> -> vector<8x128xf32>
    %7 = arith.index_cast %c0_i32_4 : i32 to index
    %c0_5 = arith.constant 0 : index
    %c0_6 = arith.constant 0 : index
    %8 = vector.load %arg2[%7, %c0_5, %c0_6] : memref<8x8x128xbf16, #tpu.memory_space<vmem>>, vector<1x8x128xbf16>
    %9 = vector.shape_cast %8 : vector<1x8x128xbf16> to vector<8x128xbf16>
    %10 = arith.extf %9 : vector<8x128xbf16> to vector<8x128xf32>
    %11 = arith.addf %10, %6 : vector<8x128xf32>
    %12 = math.tanh %11 : vector<8x128xf32>
    %13 = arith.index_cast %c0_i32_4 : i32 to index
    %c0_7 = arith.constant 0 : index
    %c0_8 = arith.constant 0 : index
    %14 = vector.load %arg4[%13, %c0_7, %c0_8] : memref<8x8x128xf32, #tpu.memory_space<vmem>>, vector<1x8x128xf32>
    %15 = vector.shape_cast %14 : vector<1x8x128xf32> to vector<8x128xf32>
    %16 = vector.shape_cast %12 : vector<8x128xf32> to vector<1x8x128xf32>
    tpu.vector_store %arg4[%13, %c0_7, %c0_8], %16 {strides = array<i32>} : memref<8x8x128xf32, #tpu.memory_space<vmem>>, vector<1x8x128xf32>,
    %c1_i32 = arith.constant 1 : i32
    %17 = arith.truncf %12 : vector<8x128xf32> to vector<8x128xbf16>
    %cst_9 = arith.constant dense<0.000000e+00> : vector<8x128xf32>
    %18 = tpu.matmul %17, %3, %cst_9 {dimension_numbers = #tpu.dot_dimension_numbers<[1], [0], [0], [1], [0, 0, 1, 1], [], []>} : vector<8x128xbf16>, vector<128x128xbf16>, vector<8x128xf32> -> vector<8x128xf32>
    %19 = arith.index_cast %c1_i32 : i32 to index
    %c0_10 = arith.constant 0 : index
    %c0_11 = arith.constant 0 : index
    %20 = vector.load %arg2[%19, %c0_10, %c0_11] : memref<8x8x128xbf16, #tpu.memory_space<vmem>>, vector<1x8x128xbf16>
    %21 = vector.shape_cast %20 : vector<1x8x128xbf16> to vector<8x128xbf16>
    %22 = arith.extf %21 : vector<8x128xbf16> to vector<8x128xf32>
    %23 = arith.addf %22, %18 : vector<8x128xf32>
    %24 = math.tanh %23 : vector<8x128xf32>
    %25 = arith.index_cast %c1_i32 : i32 to index
    %c0_12 = arith.constant 0 : index
    %c0_13 = arith.constant 0 : index
    %26 = vector.load %arg4[%25, %c0_12, %c0_13] : memref<8x8x128xf32, #tpu.memory_space<vmem>>, vector<1x8x128xf32>
    %27 = vector.shape_cast %26 : vector<1x8x128xf32> to vector<8x128xf32>
    %28 = vector.shape_cast %24 : vector<8x128xf32> to vector<1x8x128xf32>
    tpu.vector_store %arg4[%25, %c0_12, %c0_13], %28 {strides = array<i32>} : memref<8x8x128xf32, #tpu.memory_space<vmem>>, vector<1x8x128xf32>,
    %c2_i32 = arith.constant 2 : i32
    %29 = arith.truncf %24 : vector<8x128xf32> to vector<8x128xbf16>
    %cst_14 = arith.constant dense<0.000000e+00> : vector<8x128xf32>
    %30 = tpu.matmul %29, %3, %cst_14 {dimension_numbers = #tpu.dot_dimension_numbers<[1], [0], [0], [1], [0, 0, 1, 1], [], []>} : vector<8x128xbf16>, vector<128x128xbf16>, vector<8x128xf32> -> vector<8x128xf32>
    %31 = arith.index_cast %c2_i32 : i32 to index
    %c0_15 = arith.constant 0 : index
    %c0_16 = arith.constant 0 : index
    %32 = vector.load %arg2[%31, %c0_15, %c0_16] : memref<8x8x128xbf16, #tpu.memory_space<vmem>>, vector<1x8x128xbf16>
    %33 = vector.shape_cast %32 : vector<1x8x128xbf16> to vector<8x128xbf16>
    %34 = arith.extf %33 : vector<8x128xbf16> to vector<8x128xf32>
    %35 = arith.addf %34, %30 : vector<8x128xf32>
    %36 = math.tanh %35 : vector<8x128xf32>
    %37 = arith.index_cast %c2_i32 : i32 to index
    %c0_17 = arith.constant 0 : index
    %c0_18 = arith.constant 0 : index
    %38 = vector.load %arg4[%37, %c0_17, %c0_18] : memref<8x8x128xf32, #tpu.memory_space<vmem>>, vector<1x8x128xf32>
    %39 = vector.shape_cast %38 : vector<1x8x128xf32> to vector<8x128xf32>
    %40 = vector.shape_cast %36 : vector<8x128xf32> to vector<1x8x128xf32>
    tpu.vector_store %arg4[%37, %c0_17, %c0_18], %40 {strides = array<i32>} : memref<8x8x128xf32, #tpu.memory_space<vmem>>, vector<1x8x128xf32>,
    %c3_i32 = arith.constant 3 : i32
    %41 = arith.truncf %36 : vector<8x128xf32> to vector<8x128xbf16>
    %cst_19 = arith.constant dense<0.000000e+00> : vector<8x128xf32>
    %42 = tpu.matmul %41, %3, %cst_19 {dimension_numbers = #tpu.dot_dimension_numbers<[1], [0], [0], [1], [0, 0, 1, 1], [], []>} : vector<8x128xbf16>, vector<128x128xbf16>, vector<8x128xf32> -> vector<8x128xf32>
    %43 = arith.index_cast %c3_i32 : i32 to index
    %c0_20 = arith.constant 0 : index
    %c0_21 = arith.constant 0 : index
    %44 = vector.load %arg2[%43, %c0_20, %c0_21] : memref<8x8x128xbf16, #tpu.memory_space<vmem>>, vector<1x8x128xbf16>
    %45 = vector.shape_cast %44 : vector<1x8x128xbf16> to vector<8x128xbf16>
    %46 = arith.extf %45 : vector<8x128xbf16> to vector<8x128xf32>
    %47 = arith.addf %46, %42 : vector<8x128xf32>
    %48 = math.tanh %47 : vector<8x128xf32>
    %49 = arith.index_cast %c3_i32 : i32 to index
    %c0_22 = arith.constant 0 : index
    %c0_23 = arith.constant 0 : index
    %50 = vector.load %arg4[%49, %c0_22, %c0_23] : memref<8x8x128xf32, #tpu.memory_space<vmem>>, vector<1x8x128xf32>
    %51 = vector.shape_cast %50 : vector<1x8x128xf32> to vector<8x128xf32>
    %52 = vector.shape_cast %48 : vector<8x128xf32> to vector<1x8x128xf32>
    tpu.vector_store %arg4[%49, %c0_22, %c0_23], %52 {strides = array<i32>} : memref<8x8x128xf32, #tpu.memory_space<vmem>>, vector<1x8x128xf32>,
    %c4_i32 = arith.constant 4 : i32
    %53 = arith.truncf %48 : vector<8x128xf32> to vector<8x128xbf16>
    %cst_24 = arith.constant dense<0.000000e+00> : vector<8x128xf32>
    %54 = tpu.matmul %53, %3, %cst_24 {dimension_numbers = #tpu.dot_dimension_numbers<[1], [0], [0], [1], [0, 0, 1, 1], [], []>} : vector<8x128xbf16>, vector<128x128xbf16>, vector<8x128xf32> -> vector<8x128xf32>
    %55 = arith.index_cast %c4_i32 : i32 to index
    %c0_25 = arith.constant 0 : index
    %c0_26 = arith.constant 0 : index
    %56 = vector.load %arg2[%55, %c0_25, %c0_26] : memref<8x8x128xbf16, #tpu.memory_space<vmem>>, vector<1x8x128xbf16>
    %57 = vector.shape_cast %56 : vector<1x8x128xbf16> to vector<8x128xbf16>
    %58 = arith.extf %57 : vector<8x128xbf16> to vector<8x128xf32>
    %59 = arith.addf %58, %54 : vector<8x128xf32>
    %60 = math.tanh %59 : vector<8x128xf32>
    %61 = arith.index_cast %c4_i32 : i32 to index
    %c0_27 = arith.constant 0 : index
    %c0_28 = arith.constant 0 : index
    %62 = vector.load %arg4[%61, %c0_27, %c0_28] : memref<8x8x128xf32, #tpu.memory_space<vmem>>, vector<1x8x128xf32>
    %63 = vector.shape_cast %62 : vector<1x8x128xf32> to vector<8x128xf32>
    %64 = vector.shape_cast %60 : vector<8x128xf32> to vector<1x8x128xf32>
    tpu.vector_store %arg4[%61, %c0_27, %c0_28], %64 {strides = array<i32>} : memref<8x8x128xf32, #tpu.memory_space<vmem>>, vector<1x8x128xf32>,
    %c5_i32 = arith.constant 5 : i32
    %65 = arith.truncf %60 : vector<8x128xf32> to vector<8x128xbf16>
    %cst_29 = arith.constant dense<0.000000e+00> : vector<8x128xf32>
    %66 = tpu.matmul %65, %3, %cst_29 {dimension_numbers = #tpu.dot_dimension_numbers<[1], [0], [0], [1], [0, 0, 1, 1], [], []>} : vector<8x128xbf16>, vector<128x128xbf16>, vector<8x128xf32> -> vector<8x128xf32>
    %67 = arith.index_cast %c5_i32 : i32 to index
    %c0_30 = arith.constant 0 : index
    %c0_31 = arith.constant 0 : index
    %68 = vector.load %arg2[%67, %c0_30, %c0_31] : memref<8x8x128xbf16, #tpu.memory_space<vmem>>, vector<1x8x128xbf16>
    %69 = vector.shape_cast %68 : vector<1x8x128xbf16> to vector<8x128xbf16>
    %70 = arith.extf %69 : vector<8x128xbf16> to vector<8x128xf32>
    %71 = arith.addf %70, %66 : vector<8x128xf32>
    %72 = math.tanh %71 : vector<8x128xf32>
    %73 = arith.index_cast %c5_i32 : i32 to index
    %c0_32 = arith.constant 0 : index
    %c0_33 = arith.constant 0 : index
    %74 = vector.load %arg4[%73, %c0_32, %c0_33] : memref<8x8x128xf32, #tpu.memory_space<vmem>>, vector<1x8x128xf32>
    %75 = vector.shape_cast %74 : vector<1x8x128xf32> to vector<8x128xf32>
    %76 = vector.shape_cast %72 : vector<8x128xf32> to vector<1x8x128xf32>
    tpu.vector_store %arg4[%73, %c0_32, %c0_33], %76 {strides = array<i32>} : memref<8x8x128xf32, #tpu.memory_space<vmem>>, vector<1x8x128xf32>,
    %c6_i32 = arith.constant 6 : i32
    %77 = arith.truncf %72 : vector<8x128xf32> to vector<8x128xbf16>
    %cst_34 = arith.constant dense<0.000000e+00> : vector<8x128xf32>
    %78 = tpu.matmul %77, %3, %cst_34 {dimension_numbers = #tpu.dot_dimension_numbers<[1], [0], [0], [1], [0, 0, 1, 1], [], []>} : vector<8x128xbf16>, vector<128x128xbf16>, vector<8x128xf32> -> vector<8x128xf32>
    %79 = arith.index_cast %c6_i32 : i32 to index
    %c0_35 = arith.constant 0 : index
    %c0_36 = arith.constant 0 : index
    %80 = vector.load %arg2[%79, %c0_35, %c0_36] : memref<8x8x128xbf16, #tpu.memory_space<vmem>>, vector<1x8x128xbf16>
    %81 = vector.shape_cast %80 : vector<1x8x128xbf16> to vector<8x128xbf16>
    %82 = arith.extf %81 : vector<8x128xbf16> to vector<8x128xf32>
    %83 = arith.addf %82, %78 : vector<8x128xf32>
    %84 = math.tanh %83 : vector<8x128xf32>
    %85 = arith.index_cast %c6_i32 : i32 to index
    %c0_37 = arith.constant 0 : index
    %c0_38 = arith.constant 0 : index
    %86 = vector.load %arg4[%85, %c0_37, %c0_38] : memref<8x8x128xf32, #tpu.memory_space<vmem>>, vector<1x8x128xf32>
    %87 = vector.shape_cast %86 : vector<1x8x128xf32> to vector<8x128xf32>
    %88 = vector.shape_cast %84 : vector<8x128xf32> to vector<1x8x128xf32>
    tpu.vector_store %arg4[%85, %c0_37, %c0_38], %88 {strides = array<i32>} : memref<8x8x128xf32, #tpu.memory_space<vmem>>, vector<1x8x128xf32>,
    %c7_i32 = arith.constant 7 : i32
    %89 = arith.truncf %84 : vector<8x128xf32> to vector<8x128xbf16>
    %cst_39 = arith.constant dense<0.000000e+00> : vector<8x128xf32>
    %90 = tpu.matmul %89, %3, %cst_39 {dimension_numbers = #tpu.dot_dimension_numbers<[1], [0], [0], [1], [0, 0, 1, 1], [], []>} : vector<8x128xbf16>, vector<128x128xbf16>, vector<8x128xf32> -> vector<8x128xf32>
    %91 = arith.index_cast %c7_i32 : i32 to index
    %c0_40 = arith.constant 0 : index
    %c0_41 = arith.constant 0 : index
    %92 = vector.load %arg2[%91, %c0_40, %c0_41] : memref<8x8x128xbf16, #tpu.memory_space<vmem>>, vector<1x8x128xbf16>
    %93 = vector.shape_cast %92 : vector<1x8x128xbf16> to vector<8x128xbf16>
    %94 = arith.extf %93 : vector<8x128xbf16> to vector<8x128xf32>
    %95 = arith.addf %94, %90 : vector<8x128xf32>
    %96 = math.tanh %95 : vector<8x128xf32>
    %97 = arith.index_cast %c7_i32 : i32 to index
    %c0_42 = arith.constant 0 : index
    %c0_43 = arith.constant 0 : index
    %98 = vector.load %arg4[%97, %c0_42, %c0_43] : memref<8x8x128xf32, #tpu.memory_space<vmem>>, vector<1x8x128xf32>
    %99 = vector.shape_cast %98 : vector<1x8x128xf32> to vector<8x128xf32>
    %100 = vector.shape_cast %96 : vector<8x128xf32> to vector<1x8x128xf32>
    tpu.vector_store %arg4[%97, %c0_42, %c0_43], %100 {strides = array<i32>} : memref<8x8x128xf32, #tpu.memory_space<vmem>>, vector<1x8x128xf32>,
    %c8_i32 = arith.constant 8 : i32
    %c0_44 = arith.constant 0 : index
    %c0_45 = arith.constant 0 : index
    %101 = vector.load %arg5[%c0_44, %c0_45] : memref<8x128xf32, #tpu.memory_space<vmem>>, vector<8x128xf32>
    tpu.vector_store %arg5[%c0_44, %c0_45], %96 {strides = array<i32>} : memref<8x128xf32, #tpu.memory_space<vmem>>, vector<8x128xf32>,
    return
  }
  func.func @transform_0(%arg0: i32, %arg1: i32) -> (i32, i32, i32) {
    %c0_i32 = arith.constant 0 : i32
    %c0_i32_0 = arith.constant 0 : i32
    return %arg1, %arg0, %c0_i32 : i32, i32, i32
  }
  func.func @transform_1(%arg0: i32, %arg1: i32) -> (i32, i32) {
    %c0_i32 = arith.constant 0 : i32
    %c0_i32_0 = arith.constant 0 : i32
    %c0_i32_1 = arith.constant 0 : i32
    return %c0_i32, %c0_i32_0 : i32, i32
  }
  func.func @transform_2(%arg0: i32, %arg1: i32) -> (i32, i32, i32) {
    %c0_i32 = arith.constant 0 : i32
    %c0_i32_0 = arith.constant 0 : i32
    return %arg1, %arg0, %c0_i32 : i32, i32, i32
  }
}

</mosaic_0001>

<llo_original>
// kernel: tpu_custom_call.1
$region0: #{tpu_custom_call.1}
  #allocation0 [shape = 'u32[]', space=smem, size = 0x4, offset = 0x4, fixed_abs, tag = 'smem constant byte address 0x4 - core index']
  #allocation1 [shape = 'u32[144,128]{1,0:T(1,128)}', space=vmem, size = 0x12000, scoped, tag = 'internal scratch']
  #allocation2 [shape = 'f32[8,128]{1,0:T(8,128)}', space=vmem, size = 0x1000, scoped, tag = 'scratch operand']
  %s0 = inlined_call_operand.hbm [shape: bf16[8,8,128], index: 0, kind: input, shape index: {}]
  %s1 = inlined_call_operand.hbm [shape: bf16[128,128], index: 1, kind: input, shape index: {}]
  %s2 = inlined_call_operand.hbm [shape: f32[8,8,128], index: 2, kind: output, shape index: {}]
  %s3 = sld [smem:[#allocation0]]
  $region30: #{tpu_custom_call.1} parent=0
    _
  %s5 = ssub.s32 1, %s3
  %s6 = scalar_select 0, %s5, %s3
  $region1: #{tpu_custom_call.1} parent=0
    #allocation3 [shape = 'u8[16384]{0}', space=vmem, size = 0x4000, scoped, tag = 'input window, operand 0, single buffered']
    #allocation4 [shape = 's32[1]{0}', space=sflag, size = 0x4, scoped, tag = 'scoped memory for tpu_custom_call.1']
    #allocation5 [shape = 's32[1]{0}', space=sflag, size = 0x4, scoped, tag = 'scoped memory for tpu_custom_call.1']
    #allocation6 [shape = 'u8[32768]{0}', space=vmem, size = 0x8000, scoped, tag = 'input window, operand 1, single buffered']
    #allocation7 [shape = 's32[1]{0}', space=sflag, size = 0x4, scoped, tag = 'scoped memory for tpu_custom_call.1']
    #allocation8 [shape = 'u8[32768]{0}', space=vmem, size = 0x8000, scoped, tag = 'output window, operand 0, single buffered']
    %7 = vsyncpa [#allocation4], 0
    %8 = vsyncpa [#allocation7], 0
    %9 = vsyncpa [#allocation5], 0
    // Predicated region
    $region2: #{tpu_custom_call.1} parent=1 // pred_check
      _
    $region3: #{tpu_custom_call.1} parent=1 // pred_check_branch
      %11 = sbr.rel (0) target = $region5
    $region4: #{tpu_custom_call.1} parent=1 // pred_region
      %s13 = ssub.s32 512, 512
      %14 = vsyncadd [#allocation4], %s13
      %s15 = sshll.u32 [#allocation3], 4
      %s16 = int_to_ptr.vmem [resolvable:$true] %s15
      %21 = dma.hbm_to_vmem [thread:$0]  %s0, 512, %s16, [#allocation4], 64, 64, 4
    $region5: #{tpu_custom_call.1} parent=1 // pred_fallthru
      _
    // Predicated region
    $region6: #{tpu_custom_call.1} parent=1 // pred_check
      _
    $region7: #{tpu_custom_call.1} parent=1 // pred_check_branch
      %23 = sbr.rel (0) target = $region9
    $region8: #{tpu_custom_call.1} parent=1 // pred_region
      %s25 = ssub.s32 1024, 1024
      %26 = vsyncadd [#allocation7], %s25
      %s27 = sshll.u32 [#allocation6], 4
      %s28 = int_to_ptr.vmem [resolvable:$true] %s27
      %33 = dma.hbm_to_vmem [thread:$0]  %s1, 1024, %s28, [#allocation7], 64, 64, 4
    $region9: #{tpu_custom_call.1} parent=1 // pred_fallthru
      _
    // Predicated region
    $region10: #{tpu_custom_call.1} parent=1 // pred_check
      _
    $region11: #{tpu_custom_call.1} parent=1 // pred_check_branch
      %35 = sbr.rel (0) target = $region13
    $region12: #{tpu_custom_call.1} parent=1 // pred_region
      %36 = dma.done [#allocation4], 512
    $region13: #{tpu_custom_call.1} parent=1 // pred_fallthru
      _
    // Predicated region
    $region14: #{tpu_custom_call.1} parent=1 // pred_check
      _
    $region15: #{tpu_custom_call.1} parent=1 // pred_check_branch
      %38 = sbr.rel (0) target = $region17
    $region16: #{tpu_custom_call.1} parent=1 // pred_region
      %39 = dma.done [#allocation7], 1024
    $region17: #{tpu_custom_call.1} parent=1 // pred_fallthru
      _
    %p41 = scmp.eq.s32.totalorder 0, 0
    // Predicated region
    $region18: #{tpu_custom_call.1} parent=1 // pred_check
      %p42 = pneg %p41
    $region19: #{tpu_custom_call.1} parent=1 // pred_check_branch
      %44 = sbr.rel (%p42) target = $region21
    $region20: #{tpu_custom_call.1} parent=1 // pred_region
      %45 = vst [vmem:[#allocation2] sm:$0xff] 0.0
    $region21: #{tpu_custom_call.1} parent=1 // pred_fallthru
      _
    %v46 = vld [vmem:[#allocation6] sm:$0xf]
    %v47 = vld [vmem:[#allocation6 + $0x4] sm:$0xf]
    %v48 = vld [vmem:[#allocation6 + $0x8] sm:$0xf]
    %v49 = vld [vmem:[#allocation6 + $0xc] sm:$0xf]
    %v50 = vld [vmem:[#allocation6 + $0x10] sm:$0xf]
    %v51 = vld [vmem:[#allocation6 + $0x14] sm:$0xf]
    %v52 = vld [vmem:[#allocation6 + $0x18] sm:$0xf]
    %v53 = vld [vmem:[#allocation6 + $0x1c] sm:$0xf]
    %v54 = vld [vmem:[#allocation6 + $0x20] sm:$0xf]
    %v55 = vld [vmem:[#allocation6 + $0x24] sm:$0xf]
    %v56 = vld [vmem:[#allocation6 + $0x28] sm:$0xf]
    %v57 = vld [vmem:[#allocation6 + $0x2c] sm:$0xf]
    %v58 = vld [vmem:[#allocation6 + $0x30] sm:$0xf]
    %v59 = vld [vmem:[#allocation6 + $0x34] sm:$0xf]
    %v60 = vld [vmem:[#allocation6 + $0x38] sm:$0xf]
    %v61 = vld [vmem:[#allocation6 + $0x3c] sm:$0xf]
    %v62 = vld [vmem:[#allocation2] sm:$0xff]
    %v63 = vpack.c.bf16 %v62, %v62
    %v80 = vunpack.c.l.b16 %v46
    %v81 = vunpack.c.l.b16 %v47
    %v82 = vunpack.c.l.b16 %v48
    %v83 = vunpack.c.l.b16 %v49
    %v84 = vunpack.c.l.b16 %v50
    %v85 = vunpack.c.l.b16 %v51
    %v86 = vunpack.c.l.b16 %v52
    %v87 = vunpack.c.l.b16 %v53
    %v88 = vunpack.c.l.b16 %v54
    %v89 = vunpack.c.l.b16 %v55
    %v90 = vunpack.c.l.b16 %v56
    %v91 = vunpack.c.l.b16 %v57
    %v92 = vunpack.c.l.b16 %v58
    %v93 = vunpack.c.l.b16 %v59
    %v94 = vunpack.c.l.b16 %v60
    %v95 = vunpack.c.l.b16 %v61
    %v96 = vpack.c.b16 %v81, %v80
    %v97 = vpack.c.b16 %v83, %v82
    %v98 = vpack.c.b16 %v85, %v84
    %v99 = vpack.c.b16 %v87, %v86
    %v100 = vpack.c.b16 %v89, %v88
    %v101 = vpack.c.b16 %v91, %v90
    %v102 = vpack.c.b16 %v93, %v92
    %v103 = vpack.c.b16 %v95, %v94
    %112 = vmatprep.subr.bf16.mxu0 0
    %113 = vmatpush1.bf16.msra.mxu0 %v103
    %114 = vmatprep.subr.bf16.mxu0 0
    %115 = vmatpush1.bf16.msra.mxu0 %v102
    %116 = vmatprep.subr.bf16.mxu0 0
    %117 = vmatpush1.bf16.msra.mxu0 %v101
    %118 = vmatprep.subr.bf16.mxu0 0
    %119 = vmatpush1.bf16.msra.mxu0 %v100
    %120 = vmatprep.subr.bf16.mxu0 0
    %121 = vmatpush1.bf16.msra.mxu0 %v99
    %122 = vmatprep.subr.bf16.mxu0 0
    %123 = vmatpush1.bf16.msra.mxu0 %v98
    %124 = vmatprep.subr.bf16.mxu0 0
    %125 = vmatpush1.bf16.msra.mxu0 %v97
    %126 = vmatprep.subr.bf16.mxu0 0
    %127 = vmatpush1.bf16.msra.mxu0 %v96
    %128 = vmatprep.subr.bf16.mxu0 0
    %129 = vmatpush2.bf16.msra.mxu0 0
    %130 = vmatprep.subr.bf16.mxu0 0
    %131 = vmatpush2.bf16.msra.mxu0 0
    %132 = vmatprep.subr.bf16.mxu0 0
    %133 = vmatpush2.bf16.msra.mxu0 0
    %134 = vmatprep.subr.bf16.mxu0 0
    %135 = vmatpush2.bf16.msra.mxu0 0
    %136 = vmatprep.subr.bf16.mxu0 0
    %137 = vmatpush2.bf16.msra.mxu0 0
    %138 = vmatprep.subr.bf16.mxu0 0
    %139 = vmatpush2.bf16.msra.mxu0 0
    %140 = vmatprep.subr.bf16.mxu0 0
    %141 = vmatpush2.bf16.msra.mxu0 0
    %142 = vmatprep.subr.bf16.mxu0 0
    %143 = vmatpush2.bf16.msra.mxu0 0
    %144 = vmatprep.mubr.bf16.mxu0 0
    %145 = vmatmul.mubr.bf16.gmra.mxu0 %v63
    %v146 = vpop.f32.mrf.mxu0
    %v147 = vadd.f32 0.0, %v146
    %v148 = vpop.f32.mrf.mxu0
    %v149 = vpop.f32.mrf.mxu0
    %v150 = vpop.f32.mrf.mxu0
    %151 = vdwg.mxu0
    %v152 = vld [vmem:[#allocation3] sm:$0xf]
    %v153 = vunpack.c.l.bf16 %v152
    %v154 = vadd.f32 %v153, %v147
    %v155 = vtanh.pop %v154
    %156 = vst [vmem:[#allocation8] sm:$0xff] %v155
    %v157 = vpack.c.bf16 %v155, %v155
    %158 = vmatprep.subr.bf16.mxu0 0
    %159 = vmatpush1.bf16.msra.mxu0 %v103
    %160 = vmatprep.subr.bf16.mxu0 0
    %161 = vmatpush1.bf16.msra.mxu0 %v102
    %162 = vmatprep.subr.bf16.mxu0 0
    %163 = vmatpush1.bf16.msra.mxu0 %v101
    %164 = vmatprep.subr.bf16.mxu0 0
    %165 = vmatpush1.bf16.msra.mxu0 %v100
    %166 = vmatprep.subr.bf16.mxu0 0
    %167 = vmatpush1.bf16.msra.mxu0 %v99
    %168 = vmatprep.subr.bf16.mxu0 0
    %169 = vmatpush1.bf16.msra.mxu0 %v98
    %170 = vmatprep.subr.bf16.mxu0 0
    %171 = vmatpush1.bf16.msra.mxu0 %v97
    %172 = vmatprep.subr.bf16.mxu0 0
    %173 = vmatpush1.bf16.msra.mxu0 %v96
    %174 = vmatprep.subr.bf16.mxu0 0
    %175 = vmatpush2.bf16.msra.mxu0 0
    %176 = vmatprep.subr.bf16.mxu0 0
    %177 = vmatpush2.bf16.msra.mxu0 0
    %178 = vmatprep.subr.bf16.mxu0 0
    %179 = vmatpush2.bf16.msra.mxu0 0
    %180 = vmatprep.subr.bf16.mxu0 0
    %181 = vmatpush2.bf16.msra.mxu0 0
    %182 = vmatprep.subr.bf16.mxu0 0
    %183 = vmatpush2.bf16.msra.mxu0 0
    %184 = vmatprep.subr.bf16.mxu0 0
    %185 = vmatpush2.bf16.msra.mxu0 0
    %186 = vmatprep.subr.bf16.mxu0 0
    %187 = vmatpush2.bf16.msra.mxu0 0
    %188 = vmatprep.subr.bf16.mxu0 0
    %189 = vmatpush2.bf16.msra.mxu0 0
    %190 = vmatprep.mubr.bf16.mxu0 0
    %191 = vmatmul.mubr.bf16.gmra.mxu0 %v157
    %v192 = vpop.f32.mrf.mxu0
    %v193 = vadd.f32 0.0, %v192
    %v194 = vpop.f32.mrf.mxu0
    %v195 = vpop.f32.mrf.mxu0
    %v196 = vpop.f32.mrf.mxu0
    %197 = vdwg.mxu0
    %s198 = scalar_lea.vmem [#allocation3], 4
    %v199 = vld [vmem:[%s198] sm:$0xf]
    %v200 = vunpack.c.l.bf16 %v199
    %v201 = vadd.f32 %v200, %v193
    %v202 = vtanh.pop %v201
    %s203 = scalar_lea.vmem [#allocation8], 8
    %204 = vst [vmem:[%s203] sm:$0xff] %v202
    %v205 = vpack.c.bf16 %v202, %v202
    %206 = vmatprep.subr.bf16.mxu0 0
    %207 = vmatpush1.bf16.msra.mxu0 %v103
    %208 = vmatprep.subr.bf16.mxu0 0
    %209 = vmatpush1.bf16.msra.mxu0 %v102
    %210 = vmatprep.subr.bf16.mxu0 0
    %211 = vmatpush1.bf16.msra.mxu0 %v101
    %212 = vmatprep.subr.bf16.mxu0 0
    %213 = vmatpush1.bf16.msra.mxu0 %v100
    %214 = vmatprep.subr.bf16.mxu0 0
    %215 = vmatpush1.bf16.msra.mxu0 %v99
    %216 = vmatprep.subr.bf16.mxu0 0
    %217 = vmatpush1.bf16.msra.mxu0 %v98
    %218 = vmatprep.subr.bf16.mxu0 0
    %219 = vmatpush1.bf16.msra.mxu0 %v97
    %220 = vmatprep.subr.bf16.mxu0 0
    %221 = vmatpush1.bf16.msra.mxu0 %v96
    %222 = vmatprep.subr.bf16.mxu0 0
    %223 = vmatpush2.bf16.msra.mxu0 0
    %224 = vmatprep.subr.bf16.mxu0 0
    %225 = vmatpush2.bf16.msra.mxu0 0
    %226 = vmatprep.subr.bf16.mxu0 0
    %227 = vmatpush2.bf16.msra.mxu0 0
    %228 = vmatprep.subr.bf16.mxu0 0
    %229 = vmatpush2.bf16.msra.mxu0 0
    %230 = vmatprep.subr.bf16.mxu0 0
    %231 = vmatpush2.bf16.msra.mxu0 0
    %232 = vmatprep.subr.bf16.mxu0 0
    %233 = vmatpush2.bf16.msra.mxu0 0
    %234 = vmatprep.subr.bf16.mxu0 0
    %235 = vmatpush2.bf16.msra.mxu0 0
    %236 = vmatprep.subr.bf16.mxu0 0
    %237 = vmatpush2.bf16.msra.mxu0 0
    %238 = vmatprep.mubr.bf16.mxu0 0
    %239 = vmatmul.mubr.bf16.gmra.mxu0 %v205
    %v240 = vpop.f32.mrf.mxu0
    %v241 = vadd.f32 0.0, %v240
    %v242 = vpop.f32.mrf.mxu0
    %v243 = vpop.f32.mrf.mxu0
    %v244 = vpop.f32.mrf.mxu0
    %245 = vdwg.mxu0
    %s246 = scalar_lea.vmem [#allocation3], 8
    %v247 = vld [vmem:[%s246] sm:$0xf]
    %v248 = vunpack.c.l.bf16 %v247
    %v249 = vadd.f32 %v248, %v241
    %v250 = vtanh.pop %v249
    %s251 = scalar_lea.vmem [#allocation8], 16
    %252 = vst [vmem:[%s251] sm:$0xff] %v250
    %v253 = vpack.c.bf16 %v250, %v250
    %254 = vmatprep.subr.bf16.mxu0 0
    %255 = vmatpush1.bf16.msra.mxu0 %v103
    %256 = vmatprep.subr.bf16.mxu0 0
    %257 = vmatpush1.bf16.msra.mxu0 %v102
    %258 = vmatprep.subr.bf16.mxu0 0
    %259 = vmatpush1.bf16.msra.mxu0 %v101
    %260 = vmatprep.subr.bf16.mxu0 0
    %261 = vmatpush1.bf16.msra.mxu0 %v100
    %262 = vmatprep.subr.bf16.mxu0 0
    %263 = vmatpush1.bf16.msra.mxu0 %v99
    %264 = vmatprep.subr.bf16.mxu0 0
    %265 = vmatpush1.bf16.msra.mxu0 %v98
    %266 = vmatprep.subr.bf16.mxu0 0
    %267 = vmatpush1.bf16.msra.mxu0 %v97
    %268 = vmatprep.subr.bf16.mxu0 0
    %269 = vmatpush1.bf16.msra.mxu0 %v96
    %270 = vmatprep.subr.bf16.mxu0 0
    %271 = vmatpush2.bf16.msra.mxu0 0
    %272 = vmatprep.subr.bf16.mxu0 0
    %273 = vmatpush2.bf16.msra.mxu0 0
    %274 = vmatprep.subr.bf16.mxu0 0
    %275 = vmatpush2.bf16.msra.mxu0 0
    %276 = vmatprep.subr.bf16.mxu0 0
    %277 = vmatpush2.bf16.msra.mxu0 0
    %278 = vmatprep.subr.bf16.mxu0 0
    %279 = vmatpush2.bf16.msra.mxu0 0
    %280 = vmatprep.subr.bf16.mxu0 0
    %281 = vmatpush2.bf16.msra.mxu0 0
    %282 = vmatprep.subr.bf16.mxu0 0
    %283 = vmatpush2.bf16.msra.mxu0 0
    %284 = vmatprep.subr.bf16.mxu0 0
    %285 = vmatpush2.bf16.msra.mxu0 0
    %286 = vmatprep.mubr.bf16.mxu0 0
    %287 = vmatmul.mubr.bf16.gmra.mxu0 %v253
    %v288 = vpop.f32.mrf.mxu0
    %v289 = vadd.f32 0.0, %v288
    %v290 = vpop.f32.mrf.mxu0
    %v291 = vpop.f32.mrf.mxu0
    %v292 = vpop.f32.mrf.mxu0
    %293 = vdwg.mxu0
    %s294 = scalar_lea.vmem [#allocation3], 12
    %v295 = vld [vmem:[%s294] sm:$0xf]
    %v296 = vunpack.c.l.bf16 %v295
    %v297 = vadd.f32 %v296, %v289
    %v298 = vtanh.pop %v297
    %s299 = scalar_lea.vmem [#allocation8], 24
    %300 = vst [vmem:[%s299] sm:$0xff] %v298
    %v301 = vpack.c.bf16 %v298, %v298
    %302 = vmatprep.subr.bf16.mxu0 0
    %303 = vmatpush1.bf16.msra.mxu0 %v103
    %304 = vmatprep.subr.bf16.mxu0 0
    %305 = vmatpush1.bf16.msra.mxu0 %v102
    %306 = vmatprep.subr.bf16.mxu0 0
    %307 = vmatpush1.bf16.msra.mxu0 %v101
    %308 = vmatprep.subr.bf16.mxu0 0
    %309 = vmatpush1.bf16.msra.mxu0 %v100
    %310 = vmatprep.subr.bf16.mxu0 0
    %311 = vmatpush1.bf16.msra.mxu0 %v99
    %312 = vmatprep.subr.bf16.mxu0 0
    %313 = vmatpush1.bf16.msra.mxu0 %v98
    %314 = vmatprep.subr.bf16.mxu0 0
    %315 = vmatpush1.bf16.msra.mxu0 %v97
    %316 = vmatprep.subr.bf16.mxu0 0
    %317 = vmatpush1.bf16.msra.mxu0 %v96
    %318 = vmatprep.subr.bf16.mxu0 0
    %319 = vmatpush2.bf16.msra.mxu0 0
    %320 = vmatprep.subr.bf16.mxu0 0
    %321 = vmatpush2.bf16.msra.mxu0 0
    %322 = vmatprep.subr.bf16.mxu0 0
    %323 = vmatpush2.bf16.msra.mxu0 0
    %324 = vmatprep.subr.bf16.mxu0 0
    %325 = vmatpush2.bf16.msra.mxu0 0
    %326 = vmatprep.subr.bf16.mxu0 0
    %327 = vmatpush2.bf16.msra.mxu0 0
    %328 = vmatprep.subr.bf16.mxu0 0
    %329 = vmatpush2.bf16.msra.mxu0 0
    %330 = vmatprep.subr.bf16.mxu0 0
    %331 = vmatpush2.bf16.msra.mxu0 0
    %332 = vmatprep.subr.bf16.mxu0 0
    %333 = vmatpush2.bf16.msra.mxu0 0
    %334 = vmatprep.mubr.bf16.mxu0 0
    %335 = vmatmul.mubr.bf16.gmra.mxu0 %v301
    %v336 = vpop.f32.mrf.mxu0
    %v337 = vadd.f32 0.0, %v336
    %v338 = vpop.f32.mrf.mxu0
    %v339 = vpop.f32.mrf.mxu0
    %v340 = vpop.f32.mrf.mxu0
    %341 = vdwg.mxu0
    %s342 = scalar_lea.vmem [#allocation3], 16
    %v343 = vld [vmem:[%s342] sm:$0xf]
    %v344 = vunpack.c.l.bf16 %v343
    %v345 = vadd.f32 %v344, %v337
    %v346 = vtanh.pop %v345
    %s347 = scalar_lea.vmem [#allocation8], 32
    %348 = vst [vmem:[%s347] sm:$0xff] %v346
    %v349 = vpack.c.bf16 %v346, %v346
    %350 = vmatprep.subr.bf16.mxu0 0
    %351 = vmatpush1.bf16.msra.mxu0 %v103
    %352 = vmatprep.subr.bf16.mxu0 0
    %353 = vmatpush1.bf16.msra.mxu0 %v102
    %354 = vmatprep.subr.bf16.mxu0 0
    %355 = vmatpush1.bf16.msra.mxu0 %v101
    %356 = vmatprep.subr.bf16.mxu0 0
    %357 = vmatpush1.bf16.msra.mxu0 %v100
    %358 = vmatprep.subr.bf16.mxu0 0
    %359 = vmatpush1.bf16.msra.mxu0 %v99
    %360 = vmatprep.subr.bf16.mxu0 0
    %361 = vmatpush1.bf16.msra.mxu0 %v98
    %362 = vmatprep.subr.bf16.mxu0 0
    %363 = vmatpush1.bf16.msra.mxu0 %v97
    %364 = vmatprep.subr.bf16.mxu0 0
    %365 = vmatpush1.bf16.msra.mxu0 %v96
    %366 = vmatprep.subr.bf16.mxu0 0
    %367 = vmatpush2.bf16.msra.mxu0 0
    %368 = vmatprep.subr.bf16.mxu0 0
    %369 = vmatpush2.bf16.msra.mxu0 0
    %370 = vmatprep.subr.bf16.mxu0 0
    %371 = vmatpush2.bf16.msra.mxu0 0
    %372 = vmatprep.subr.bf16.mxu0 0
    %373 = vmatpush2.bf16.msra.mxu0 0
    %374 = vmatprep.subr.bf16.mxu0 0
    %375 = vmatpush2.bf16.msra.mxu0 0
    %376 = vmatprep.subr.bf16.mxu0 0
    %377 = vmatpush2.bf16.msra.mxu0 0
    %378 = vmatprep.subr.bf16.mxu0 0
    %379 = vmatpush2.bf16.msra.mxu0 0
    %380 = vmatprep.subr.bf16.mxu0 0
    %381 = vmatpush2.bf16.msra.mxu0 0
    %382 = vmatprep.mubr.bf16.mxu0 0
    %383 = vmatmul.mubr.bf16.gmra.mxu0 %v349
    %v384 = vpop.f32.mrf.mxu0
    %v385 = vadd.f32 0.0, %v384
    %v386 = vpop.f32.mrf.mxu0
    %v387 = vpop.f32.mrf.mxu0
    %v388 = vpop.f32.mrf.mxu0
    %389 = vdwg.mxu0
    %s390 = scalar_lea.vmem [#allocation3], 20
    %v391 = vld [vmem:[%s390] sm:$0xf]
    %v392 = vunpack.c.l.bf16 %v391
    %v393 = vadd.f32 %v392, %v385
    %v394 = vtanh.pop %v393
    %s395 = scalar_lea.vmem [#allocation8], 40
    %396 = vst [vmem:[%s395] sm:$0xff] %v394
    %v397 = vpack.c.bf16 %v394, %v394
    %398 = vmatprep.subr.bf16.mxu0 0
    %399 = vmatpush1.bf16.msra.mxu0 %v103
    %400 = vmatprep.subr.bf16.mxu0 0
    %401 = vmatpush1.bf16.msra.mxu0 %v102
    %402 = vmatprep.subr.bf16.mxu0 0
    %403 = vmatpush1.bf16.msra.mxu0 %v101
    %404 = vmatprep.subr.bf16.mxu0 0
    %405 = vmatpush1.bf16.msra.mxu0 %v100
    %406 = vmatprep.subr.bf16.mxu0 0
    %407 = vmatpush1.bf16.msra.mxu0 %v99
    %408 = vmatprep.subr.bf16.mxu0 0
    %409 = vmatpush1.bf16.msra.mxu0 %v98
    %410 = vmatprep.subr.bf16.mxu0 0
    %411 = vmatpush1.bf16.msra.mxu0 %v97
    %412 = vmatprep.subr.bf16.mxu0 0
    %413 = vmatpush1.bf16.msra.mxu0 %v96
    %414 = vmatprep.subr.bf16.mxu0 0
    %415 = vmatpush2.bf16.msra.mxu0 0
    %416 = vmatprep.subr.bf16.mxu0 0
    %417 = vmatpush2.bf16.msra.mxu0 0
    %418 = vmatprep.subr.bf16.mxu0 0
    %419 = vmatpush2.bf16.msra.mxu0 0
    %420 = vmatprep.subr.bf16.mxu0 0
    %421 = vmatpush2.bf16.msra.mxu0 0
    %422 = vmatprep.subr.bf16.mxu0 0
    %423 = vmatpush2.bf16.msra.mxu0 0
    %424 = vmatprep.subr.bf16.mxu0 0
    %425 = vmatpush2.bf16.msra.mxu0 0
    %426 = vmatprep.subr.bf16.mxu0 0
    %427 = vmatpush2.bf16.msra.mxu0 0
    %428 = vmatprep.subr.bf16.mxu0 0
    %429 = vmatpush2.bf16.msra.mxu0 0
    %430 = vmatprep.mubr.bf16.mxu0 0
    %431 = vmatmul.mubr.bf16.gmra.mxu0 %v397
    %v432 = vpop.f32.mrf.mxu0
    %v433 = vadd.f32 0.0, %v432
    %v434 = vpop.f32.mrf.mxu0
    %v435 = vpop.f32.mrf.mxu0
    %v436 = vpop.f32.mrf.mxu0
    %437 = vdwg.mxu0
    %s438 = scalar_lea.vmem [#allocation3], 24
    %v439 = vld [vmem:[%s438] sm:$0xf]
    %v440 = vunpack.c.l.bf16 %v439
    %v441 = vadd.f32 %v440, %v433
    %v442 = vtanh.pop %v441
    %s443 = scalar_lea.vmem [#allocation8], 48
    %444 = vst [vmem:[%s443] sm:$0xff] %v442
    %v445 = vpack.c.bf16 %v442, %v442
    %446 = vmatprep.subr.bf16.mxu0 0
    %447 = vmatpush1.bf16.msra.mxu0 %v103
    %448 = vmatprep.subr.bf16.mxu0 0
    %449 = vmatpush1.bf16.msra.mxu0 %v102
    %450 = vmatprep.subr.bf16.mxu0 0
    %451 = vmatpush1.bf16.msra.mxu0 %v101
    %452 = vmatprep.subr.bf16.mxu0 0
    %453 = vmatpush1.bf16.msra.mxu0 %v100
    %454 = vmatprep.subr.bf16.mxu0 0
    %455 = vmatpush1.bf16.msra.mxu0 %v99
    %456 = vmatprep.subr.bf16.mxu0 0
    %457 = vmatpush1.bf16.msra.mxu0 %v98
    %458 = vmatprep.subr.bf16.mxu0 0
    %459 = vmatpush1.bf16.msra.mxu0 %v97
    %460 = vmatprep.subr.bf16.mxu0 0
    %461 = vmatpush1.bf16.msra.mxu0 %v96
    %462 = vmatprep.subr.bf16.mxu0 0
    %463 = vmatpush2.bf16.msra.mxu0 0
    %464 = vmatprep.subr.bf16.mxu0 0
    %465 = vmatpush2.bf16.msra.mxu0 0
    %466 = vmatprep.subr.bf16.mxu0 0
    %467 = vmatpush2.bf16.msra.mxu0 0
    %468 = vmatprep.subr.bf16.mxu0 0
    %469 = vmatpush2.bf16.msra.mxu0 0
    %470 = vmatprep.subr.bf16.mxu0 0
    %471 = vmatpush2.bf16.msra.mxu0 0
    %472 = vmatprep.subr.bf16.mxu0 0
    %473 = vmatpush2.bf16.msra.mxu0 0
    %474 = vmatprep.subr.bf16.mxu0 0
    %475 = vmatpush2.bf16.msra.mxu0 0
    %476 = vmatprep.subr.bf16.mxu0 0
    %477 = vmatpush2.bf16.msra.mxu0 0
    %478 = vmatprep.mubr.bf16.mxu0 0
    %479 = vmatmul.mubr.bf16.gmra.mxu0 %v445
    %v480 = vpop.f32.mrf.mxu0
    %v481 = vadd.f32 0.0, %v480
    %v482 = vpop.f32.mrf.mxu0
    %v483 = vpop.f32.mrf.mxu0
    %v484 = vpop.f32.mrf.mxu0
    %485 = vdwg.mxu0
    %s486 = scalar_lea.vmem [#allocation3], 28
    %v487 = vld [vmem:[%s486] sm:$0xf]
    %v488 = vunpack.c.l.bf16 %v487
    %v489 = vadd.f32 %v488, %v481
    %v490 = vtanh.pop %v489
    %s491 = scalar_lea.vmem [#allocation8], 56
    %492 = vst [vmem:[%s491] sm:$0xff] %v490
    %493 = vst [vmem:[#allocation2] sm:$0xff] %v490
    // Predicated region
    $region22: #{tpu_custom_call.1} parent=1 // pred_check
      _
    $region23: #{tpu_custom_call.1} parent=1 // pred_check_branch
      %495 = sbr.rel (0) target = $region25
    $region24: #{tpu_custom_call.1} parent=1 // pred_region
      %s497 = ssub.s32 1024, 1024
      %498 = vsyncadd [#allocation5], %s497
      %s499 = sshll.u32 [#allocation8], 4
      %s500 = int_to_ptr.vmem [resolvable:$true] %s499
      %505 = dma.vmem_to_hbm [thread:$0]  %s500, 1024, %s2, [#allocation5], 128, 128, 8
    $region25: #{tpu_custom_call.1} parent=1 // pred_fallthru
      _
    // Predicated region
    $region26: #{tpu_custom_call.1} parent=1 // pred_check
      _
    $region27: #{tpu_custom_call.1} parent=1 // pred_check_branch
      %507 = sbr.rel (0) target = $region29
    $region28: #{tpu_custom_call.1} parent=1 // pred_region
      %508 = dma.done [#allocation5], 1024
    $region29: #{tpu_custom_call.1} parent=1 // pred_fallthru
      _
    %509 = vsyncpa [#allocation4], 1
    %510 = vsyncpa [#allocation7], 1
    %511 = vsyncpa [#allocation5], 1

</llo_original>
